<compile_context>
chip_gen: v7x
topology: tpu7x:2x2x1
jax: 0.10.0
libtpu: 0.0.40
codegen_flags: <defaults>
</compile_context>

<pallas_src>
import math

import jax
import jax.numpy as jnp
from jax.experimental import pallas as pl
from jax.experimental.pallas import tpu as pltpu

_BN_EPS = 1e-5      # torch.nn.BatchNorm1d default eps
_NORM_EPS = 1e-12   # torch.nn.functional.normalize default eps


def _make_netvlad_kernel(batch, l_tile, tiles_per_core, l_valid, l_padded,
                         compute_dtype):
    """Per-L-tile kernel.

    Refs: x_ref (B, F, Lt) input dtype, w_ref (C, F) compute dtype,
    vlad_ref (B, C, F) f32 partial accumulator (resident per core),
    occsum_ref (B, C, 1) f32 partial accumulator, occ_ref (B, C, Lt) f32
    scratch.
    """

    def kernel(x_ref, w_ref, vlad_ref, occsum_ref, occ_ref):
        l_idx = pl.program_id(1)

        @pl.when(l_idx == 0)
        def _init():
            vlad_ref[...] = jnp.zeros_like(vlad_ref)
            occsum_ref[...] = jnp.zeros_like(occsum_ref)

        w = w_ref[...]                                       # (C, F)

        # occ[b] = W^T x[b]: B unrolled (C,F)@(F,Lt) MXU matmuls, f32 accum.
        # The single (C,F) weight block stays resident across the batch loop.
        # TODO(synk): switch to lax.fori_loop over b for very large batch.
        for b in range(batch):
            occ_ref[b] = jax.lax.dot_general(
                w, x_ref[b].astype(compute_dtype),
                dimension_numbers=(((1,), (0,)), ((), ())),
                preferred_element_type=jnp.float32)

        occ = occ_ref[...]                                   # (B, C, Lt) f32

        # BatchNorm1d(length): fresh module => training-mode batch stats,
        # gamma=1, beta=0, biased variance over (batch, cluster) per L index.
        # Single pass: var = E[occ^2] - mu^2; the pre-softmax shift by
        # mu*rsqrt is dropped (softmax over clusters is invariant to it).
        inv_n = 1.0 / float(batch * occ.shape[1])
        mu = jnp.sum(occ, axis=(0, 1), keepdims=True) * inv_n        # (1,1,Lt)
        m2 = jnp.sum(occ * occ, axis=(0, 1), keepdims=True) * inv_n
        var = jnp.maximum(m2 - mu * mu, 0.0)
        z = occ * jax.lax.rsqrt(var + _BN_EPS)

        # Softmax over clusters (sublane axis); exp + approx recip on the EUP.
        z = z - jnp.max(z, axis=1, keepdims=True)
        p = jnp.exp(z)
        p = p * pl.reciprocal(jnp.sum(p, axis=1, keepdims=True), approx=True)

        if l_padded:
            # Zero the softmax mass of zero-padded L lanes, otherwise each
            # padded position contributes mass 1 to occsum / mean subtraction.
            lane = jax.lax.broadcasted_iota(jnp.int32, p.shape, 2)
            global_l = (pl.program_id(0) * tiles_per_core + l_idx) * l_tile + lane
            p = jnp.where(global_l < l_valid, p, 0.0)

        occsum_ref[...] += jnp.sum(p, axis=2, keepdims=True)          # (B,C,1)

        # vlad[b] += P[b] @ x[b]^T: contract Lt (both minor dims, no transposes).
        # Note: casting the softmax weights to bf16 (mxu_dtype path) trades a
        # little assignment precision for ~3x fewer MXU passes.
        for b in range(batch):
            vlad_ref[b] += jax.lax.dot_general(
                p[b].astype(compute_dtype), x_ref[b].astype(compute_dtype),
                dimension_numbers=(((1,), (1,)), ((), ())),
                preferred_element_type=jnp.float32)

    return kernel


def _vmem_capacity_bytes():
    """Physical VMEM per TensorCore, with conservative fallbacks."""
    try:
        return int(pltpu.get_tpu_info().vmem_capacity_bytes)
    except Exception:
        pass
    try:
        kind = jax.devices()[0].device_kind.lower()
        if any(t in kind for t in ("v4", "v5", "v6", "trillium")):
            return 128 * 2**20
    except Exception:
        pass
    return 64 * 2**20          # conservative (v7x-sized) assumption


def _pick_l_tile(length_padded, per_lane_bytes, budget_bytes):
    """Largest multiple of 128 dividing length_padded that fits the budget."""
    assert length_padded % 128 == 0
    max_tile = max(128, (budget_bytes // max(per_lane_bytes, 1)) // 128 * 128)
    t = min(max_tile, length_padded)
    t = max(128, (t // 128) * 128)
    while t > 128 and length_padded % t:
        t -= 128
    return t


def netvlad_forward(x, cluster_weight, cluster_mean, *, l_tile=None,
                    mxu_dtype=None, x_tile_budget_bytes=None):
    """x: (B, F, *spatial) -> (B, cluster_size * feature_size) float32.

    mxu_dtype: optional dtype for the MXU contractions (e.g. jnp.bfloat16 for
    f32 inputs); accumulation is always f32.  Default: the input dtype.
    """
    assert x.ndim > 2, 'input must be at least 3-D'
    B, F_ = int(x.shape[0]), int(x.shape[1])
    assert cluster_weight.shape[0] == F_
    C = int(cluster_weight.shape[-1])

    x_bfl = x.reshape(B, F_, -1)                    # (B, F, L) -- no transpose
    L = int(x_bfl.shape[-1])
    x_dtype = x_bfl.dtype
    x_itemsize = jnp.dtype(x_dtype).itemsize
    compute_dtype = jnp.dtype(mxu_dtype) if mxu_dtype is not None else x_dtype

    # Pad L to a multiple of 128 (lane width); padded lanes are masked in-kernel.
    L_pad = max(128, ((L + 127) // 128) * 128)
    if L_pad != L:
        x_bfl = jnp.pad(x_bfl, ((0, 0), (0, 0), (0, L_pad - L)))

    phys_vmem = _vmem_capacity_bytes()
    if x_tile_budget_bytes is None:
        # Use more of the 128 MiB parts (v5e/v6e); keep headroom on v7x (64 MiB).
        x_tile_budget_bytes = 28 * 2**20 if phys_vmem >= 96 * 2**20 else 12 * 2**20

    per_lane_bytes = 2 * B * F_ * x_itemsize + B * C * 4   # x (2 bufs) + occ scratch
    if l_tile is None:
        l_tile = _pick_l_tile(L_pad, per_lane_bytes, x_tile_budget_bytes)
    assert L_pad % l_tile == 0 and l_tile % 128 == 0, (L_pad, l_tile)
    n_tiles = L_pad // l_tile

    # Two-TensorCore (megacore) split of the L stream; exact for this module's
    # BatchNorm, whose stats are per L index.  Even split only, for simplicity.
    n_cores = 2 if (n_tiles >= 2 and n_tiles % 2 == 0) else 1
    tiles_per_core = n_tiles // n_cores

    # Tiny parameter-side reshapes (negligible vs. x traffic).
    w_cf = jnp.transpose(cluster_weight).astype(compute_dtype)          # (C, F)
    mean_cf = jnp.transpose(cluster_mean.reshape(F_, C)).astype(jnp.float32)

    cd_itemsize = jnp.dtype(compute_dtype).itemsize
    vmem_est = (2 * B * F_ * l_tile * x_itemsize      # x tiles (double-buffered)
                + 2 * C * F_ * cd_itemsize            # cluster weights
                + B * C * l_tile * 4                  # occupancy scratch
                + 2 * B * C * F_ * 4                  # partial vlad block
                + 2 * B * C * 4)                      # partial occsum block
    vmem_cap = max(phys_vmem // 2, phys_vmem - 16 * 2**20)  # never the whole VMEM
    vmem_limit = int(min(vmem_cap, max(32 * 2**20, 2 * vmem_est)))

    kernel = _make_netvlad_kernel(B, l_tile, tiles_per_core, L, L_pad != L,
                                  compute_dtype)

    # TODO(synk): single-buffer the stationary w block (pipeline_mode=
    # pl.Buffered(1)) once verified on the target JAX version; pad C to a
    # multiple of 8 (with BN/softmax masking) if production C is unaligned.
    vlad_parts, occsum_parts = pl.pallas_call(
        kernel,
        out_shape=(
            jax.ShapeDtypeStruct((n_cores, B, C, F_), jnp.float32),
            jax.ShapeDtypeStruct((n_cores, B, C, 1), jnp.float32),
        ),
        grid_spec=pltpu.PrefetchScalarGridSpec(
            num_scalar_prefetch=0,
            grid=(n_cores, tiles_per_core),
            in_specs=[
                pl.BlockSpec((B, F_, l_tile),
                             lambda c, l: (0, 0, c * tiles_per_core + l)),
                pl.BlockSpec((C, F_), lambda c, l: (0, 0)),
            ],
            out_specs=(
                pl.BlockSpec((None, B, C, F_), lambda c, l: (c, 0, 0, 0)),
                pl.BlockSpec((None, B, C, 1), lambda c, l: (c, 0, 0, 0)),
            ),
            scratch_shapes=[pltpu.VMEM((B, C, l_tile), jnp.float32)],
        ),
        compiler_params=pltpu.CompilerParams(
            dimension_semantics=("parallel", "arbitrary"),
            vmem_limit_bytes=vmem_limit,
        ),
        cost_estimate=pl.CostEstimate(
            flops=int(4 * B * L * F_ * C),
            transcendentals=int(B * L * C),
            bytes_accessed=int(B * F_ * L_pad * x_itemsize + C * F_ * cd_itemsize
                               + n_cores * B * C * (F_ + 1) * 4),
        ),
    )(x_bfl, w_cf)

    # Tiny O(B*C*F) epilogue: combine per-core partials, subtract the
    # occupancy-weighted cluster means, fused double L2 normalization.
    vlad = jnp.sum(vlad_parts, axis=0)                    # (B, C, F) f32
    occsum = jnp.sum(occsum_parts, axis=0)                # (B, C, 1)
    vlad = vlad - occsum * mean_cf[None]                  # (B, C, F)
    sumsq = jnp.sum(vlad * vlad, axis=-1, keepdims=True)  # (B, C, 1)
    inv1 = 1.0 / jnp.maximum(jnp.sqrt(sumsq), _NORM_EPS)  # per-(b,c) norm over F
    n2 = jnp.sqrt(jnp.sum(sumsq * inv1 * inv1, axis=1, keepdims=True))
    scale = inv1 / jnp.maximum(n2, _NORM_EPS)             # fused global L2 norm
    # Row-major (B, C, F) -> (B, C*F) matches vlad.permute(0,2,1).view(B,-1).
    return (vlad * scale).reshape(B, C * F_)


def netvlad_reference(x, cluster_weight, cluster_mean):
    """Pure-JAX reference mirroring the PyTorch forward (default flags)."""
    B, F_ = x.shape[0], x.shape[1]
    C = cluster_weight.shape[-1]
    x_t = jnp.transpose(x.reshape(B, F_, -1), (0, 2, 1))        # (B, L, F)
    occ = jnp.einsum('blf,fc->blc', x_t, cluster_weight)
    mu = jnp.mean(occ, axis=(0, 2), keepdims=True)
    var = jnp.mean((occ - mu) ** 2, axis=(0, 2), keepdims=True)
    occ = (occ - mu) / jnp.sqrt(var + _BN_EPS)
    occ = jax.nn.softmax(occ, axis=-1)
    occ_sum = jnp.sum(occ, axis=1, keepdims=True)               # (B, 1, C)
    vlad = jnp.einsum('blc,blf->bcf', occ, x_t)                 # (B, C, F)
    vlad = jnp.transpose(vlad, (0, 2, 1))                       # (B, F, C)
    vlad = vlad - occ_sum * cluster_mean.reshape(1, F_, C)
    n1 = jnp.maximum(jnp.linalg.norm(vlad, axis=1, keepdims=True), _NORM_EPS)
    vlad = vlad / n1
    vlad = jnp.transpose(vlad, (0, 2, 1)).reshape(B, -1)        # (B, C*F)
    n2 = jnp.maximum(jnp.linalg.norm(vlad, axis=1, keepdims=True), _NORM_EPS)
    return vlad / n2


if __name__ == "__main__":
    key = jax.random.PRNGKey(0)
    k1, k2, k3, k4, k5 = jax.random.split(key, 5)

    feature_size, cluster_size = 32, 16
    B, H, W_sp = 2, 16, 16                      # L = H*W = 256
    std = 1.0 / math.sqrt(feature_size)

    x = jax.random.normal(k1, (B, feature_size, H, W_sp), dtype=jnp.float32)
    cluster_weight = jax.random.normal(k2, (feature_size, cluster_size), jnp.float32) * std
    cluster_bias = jax.random.normal(k3, (cluster_size,), jnp.float32) * std  # unused (add_batch_norm=True)
    cluster_mean = jax.random.normal(k4, (1, feature_size, cluster_size), jnp.float32) * std

    ref = netvlad_reference(x, cluster_weight, cluster_mean)

    # 1) f32, l_tile=128 -> grid (2, 1): exercises the parallel L split,
    #    init/accumulate and the partial-combining epilogue.
    out = netvlad_forward(x, cluster_weight, cluster_mean, l_tile=128)
    jax.block_until_ready(out)
    assert out.shape == (B, cluster_size * feature_size), out.shape
    err = float(jnp.max(jnp.abs(out - ref)))
    assert err < 5e-3, f"f32 mismatch, max|err|={err}"

    # 2) bf16 inputs (recommended production default): half the x HBM traffic.
    out_bf16 = netvlad_forward(x.astype(jnp.bfloat16),
                               cluster_weight.astype(jnp.bfloat16),
                               cluster_mean)
    jax.block_until_ready(out_bf16)
    err_bf16 = float(jnp.max(jnp.abs(out_bf16 - ref)))
    assert err_bf16 < 8e-2, f"bf16 mismatch, max|err|={err_bf16}"

    # 3) f32 inputs with bf16 MXU compute (in-kernel cast, f32 accumulation).
    out_mix = netvlad_forward(x, cluster_weight, cluster_mean,
                              mxu_dtype=jnp.bfloat16)
    jax.block_until_ready(out_mix)
    err_mix = float(jnp.max(jnp.abs(out_mix - ref)))
    assert err_mix < 8e-2, f"mixed-precision mismatch, max|err|={err_mix}"

    # 4) Ragged spatial length: L=100 -> padded to 128, masked in-kernel.
    x_rag = jax.random.normal(k5, (B, feature_size, 10, 10), dtype=jnp.float32)
    ref_rag = netvlad_reference(x_rag, cluster_weight, cluster_mean)
    out_rag = netvlad_forward(x_rag, cluster_weight, cluster_mean)
    jax.block_until_ready(out_rag)
    err_rag = float(jnp.max(jnp.abs(out_rag - ref_rag)))
    assert err_rag < 5e-3, f"ragged-L mismatch, max|err|={err_rag}"

    print("KERNEL_OK")
</pallas_src>

<mosaic_0001>
module attributes {stable_mosaic.version = 11 : i64} {
  func.func @kernel(%arg0: i32, %arg1: i32, %arg2: memref<2x32x128xf32, #tpu.memory_space<vmem>>, %arg3: memref<16x32xf32, #tpu.memory_space<vmem>>, %arg4: memref<1x2x16x32xf32, #tpu.memory_space<vmem>>, %arg5: memref<1x2x16x1xf32, #tpu.memory_space<vmem>>, %arg6: memref<2x16x128xf32, #tpu.memory_space<vmem>>) attributes {dimension_semantics = [#tpu.dimension_semantics<parallel>, #tpu.dimension_semantics<arbitrary>], iteration_bounds = array<i64: 2, 1>, scalar_prefetch = 0 : i64, scratch_operands = 1 : i64, tpu.core_type = #tpu.core_type<tc>, window_params = [{transform_indices = @transform_0, window_bounds = array<i64: 2, 32, 128>}, {pipeline_mode = #tpu.pipeline_mode<synchronous>, transform_indices = @transform_1, window_bounds = array<i64: 16, 32>}, {transform_indices = @transform_2, window_bounds = array<i64: 1, 2, 16, 32>}, {transform_indices = @transform_3, window_bounds = array<i64: 1, 2, 16, 1>}]} {
    %c0_i32 = arith.constant 0 : i32
    %0 = arith.cmpi eq, %arg1, %c0_i32 : i32
    %1 = arith.extui %0 : i1 to i32
    %c0_i32_0 = arith.constant 0 : i32
    %2 = arith.cmpi ne, %1, %c0_i32_0 : i32
    scf.if %2 {
      %cst_58 = arith.constant 0.000000e+00 : f32
      %75 = vector.broadcast %cst_58 : f32 to vector<2x16x32xf32>
      %c0_59 = arith.constant 0 : index
      %c0_60 = arith.constant 0 : index
      %c0_61 = arith.constant 0 : index
      %c0_62 = arith.constant 0 : index
      %76 = vector.load %arg4[%c0_59, %c0_60, %c0_61, %c0_62] : memref<1x2x16x32xf32, #tpu.memory_space<vmem>>, vector<1x2x16x32xf32>
      %77 = vector.shape_cast %76 : vector<1x2x16x32xf32> to vector<2x16x32xf32>
      %78 = vector.shape_cast %75 : vector<2x16x32xf32> to vector<1x2x16x32xf32>
      tpu.vector_store %arg4[%c0_59, %c0_60, %c0_61, %c0_62], %78 {strides = array<i32>} : memref<1x2x16x32xf32, #tpu.memory_space<vmem>>, vector<1x2x16x32xf32>,
      %cst_63 = arith.constant 0.000000e+00 : f32
      %79 = vector.broadcast %cst_63 : f32 to vector<2x16x1xf32>
      %c0_64 = arith.constant 0 : index
      %c0_65 = arith.constant 0 : index
      %c0_66 = arith.constant 0 : index
      %c0_67 = arith.constant 0 : index
      %80 = vector.load %arg5[%c0_64, %c0_65, %c0_66, %c0_67] : memref<1x2x16x1xf32, #tpu.memory_space<vmem>>, vector<1x2x16x1xf32>
      %81 = vector.shape_cast %80 : vector<1x2x16x1xf32> to vector<2x16x1xf32>
      %82 = vector.shape_cast %79 : vector<2x16x1xf32> to vector<1x2x16x1xf32>
      tpu.vector_store %arg5[%c0_64, %c0_65, %c0_66, %c0_67], %82 {strides = array<i32>} : memref<1x2x16x1xf32, #tpu.memory_space<vmem>>, vector<1x2x16x1xf32>,
    } else {
    }
    %c0 = arith.constant 0 : index
    %c0_1 = arith.constant 0 : index
    %3 = vector.load %arg3[%c0, %c0_1] : memref<16x32xf32, #tpu.memory_space<vmem>>, vector<16x32xf32>
    %c0_2 = arith.constant 0 : index
    %c0_3 = arith.constant 0 : index
    %c0_4 = arith.constant 0 : index
    %4 = vector.load %arg2[%c0_2, %c0_3, %c0_4] : memref<2x32x128xf32, #tpu.memory_space<vmem>>, vector<1x32x128xf32>
    %5 = vector.shape_cast %4 : vector<1x32x128xf32> to vector<32x128xf32>
    %cst = arith.constant dense<0.000000e+00> : vector<16x128xf32>
    %6 = tpu.matmul %3, %5, %cst {dimension_numbers = #tpu.dot_dimension_numbers<[1], [0], [0], [1], [0, 0, 1, 1], [], []>} : vector<16x32xf32>, vector<32x128xf32>, vector<16x128xf32> -> vector<16x128xf32>
    %c0_5 = arith.constant 0 : index
    %c0_6 = arith.constant 0 : index
    %c0_7 = arith.constant 0 : index
    %7 = vector.load %arg6[%c0_5, %c0_6, %c0_7] : memref<2x16x128xf32, #tpu.memory_space<vmem>>, vector<1x16x128xf32>
    %8 = vector.shape_cast %7 : vector<1x16x128xf32> to vector<16x128xf32>
    %9 = vector.shape_cast %6 : vector<16x128xf32> to vector<1x16x128xf32>
    tpu.vector_store %arg6[%c0_5, %c0_6, %c0_7], %9 {strides = array<i32>} : memref<2x16x128xf32, #tpu.memory_space<vmem>>, vector<1x16x128xf32>,
    %c1 = arith.constant 1 : index
    %c0_8 = arith.constant 0 : index
    %c0_9 = arith.constant 0 : index
    %10 = vector.load %arg2[%c1, %c0_8, %c0_9] : memref<2x32x128xf32, #tpu.memory_space<vmem>>, vector<1x32x128xf32>
    %11 = vector.shape_cast %10 : vector<1x32x128xf32> to vector<32x128xf32>
    %cst_10 = arith.constant dense<0.000000e+00> : vector<16x128xf32>
    %12 = tpu.matmul %3, %11, %cst_10 {dimension_numbers = #tpu.dot_dimension_numbers<[1], [0], [0], [1], [0, 0, 1, 1], [], []>} : vector<16x32xf32>, vector<32x128xf32>, vector<16x128xf32> -> vector<16x128xf32>
    %c1_11 = arith.constant 1 : index
    %c0_12 = arith.constant 0 : index
    %c0_13 = arith.constant 0 : index
    %13 = vector.load %arg6[%c1_11, %c0_12, %c0_13] : memref<2x16x128xf32, #tpu.memory_space<vmem>>, vector<1x16x128xf32>
    %14 = vector.shape_cast %13 : vector<1x16x128xf32> to vector<16x128xf32>
    %15 = vector.shape_cast %12 : vector<16x128xf32> to vector<1x16x128xf32>
    tpu.vector_store %arg6[%c1_11, %c0_12, %c0_13], %15 {strides = array<i32>} : memref<2x16x128xf32, #tpu.memory_space<vmem>>, vector<1x16x128xf32>,
    %c0_14 = arith.constant 0 : index
    %c0_15 = arith.constant 0 : index
    %c0_16 = arith.constant 0 : index
    %16 = vector.load %arg6[%c0_14, %c0_15, %c0_16] : memref<2x16x128xf32, #tpu.memory_space<vmem>>, vector<2x16x128xf32>
    %cst_17 = arith.constant dense<0.000000e+00> : vector<128xf32>
    %17 = vector.multi_reduction <add>, %16, %cst_17 [0, 1] : vector<2x16x128xf32> to vector<128xf32>
    %18 = vector.shape_cast %17 : vector<128xf32> to vector<1x1x128xf32>
    %cst_18 = arith.constant 3.125000e-02 : f32
    %19 = vector.broadcast %cst_18 : f32 to vector<1x1x128xf32>
    %20 = arith.mulf %18, %19 : vector<1x1x128xf32>
    %21 = arith.mulf %16, %16 : vector<2x16x128xf32>
    %cst_19 = arith.constant dense<0.000000e+00> : vector<128xf32>
    %22 = vector.multi_reduction <add>, %21, %cst_19 [0, 1] : vector<2x16x128xf32> to vector<128xf32>
    %23 = vector.shape_cast %22 : vector<128xf32> to vector<1x1x128xf32>
    %cst_20 = arith.constant 3.125000e-02 : f32
    %24 = vector.broadcast %cst_20 : f32 to vector<1x1x128xf32>
    %25 = arith.mulf %23, %24 : vector<1x1x128xf32>
    %26 = arith.mulf %20, %20 : vector<1x1x128xf32>
    %27 = arith.subf %25, %26 : vector<1x1x128xf32>
    %cst_21 = arith.constant 0.000000e+00 : f32
    %28 = vector.broadcast %cst_21 : f32 to vector<1x1x128xf32>
    %29 = arith.maximumf %27, %28 : vector<1x1x128xf32>
    %cst_22 = arith.constant 9.99999974E-6 : f32
    %30 = vector.broadcast %cst_22 : f32 to vector<1x1x128xf32>
    %31 = arith.addf %29, %30 : vector<1x1x128xf32>
    %32 = math.rsqrt %31 : vector<1x1x128xf32>
    %33 = vector.broadcast %32 : vector<1x1x128xf32> to vector<2x16x128xf32>
    %34 = arith.mulf %16, %33 : vector<2x16x128xf32>
    %cst_23 = arith.constant dense<0xFF800000> : vector<2x128xf32>
    %35 = vector.multi_reduction <maximumf>, %34, %cst_23 [1] : vector<2x16x128xf32> to vector<2x128xf32>
    %36 = vector.shape_cast %35 : vector<2x128xf32> to vector<2x1x128xf32>
    %37 = vector.broadcast %36 : vector<2x1x128xf32> to vector<2x16x128xf32>
    %38 = arith.subf %34, %37 : vector<2x16x128xf32>
    %39 = math.exp %38 : vector<2x16x128xf32>
    %cst_24 = arith.constant dense<0.000000e+00> : vector<2x128xf32>
    %40 = vector.multi_reduction <add>, %39, %cst_24 [1] : vector<2x16x128xf32> to vector<2x128xf32>
    %41 = vector.shape_cast %40 : vector<2x128xf32> to vector<2x1x128xf32>
    %42 = tpu.reciprocal %41 {approx = true} : vector<2x1x128xf32> -> vector<2x1x128xf32>
    %43 = vector.broadcast %42 : vector<2x1x128xf32> to vector<2x16x128xf32>
    %44 = arith.mulf %39, %43 : vector<2x16x128xf32>
    %c0_25 = arith.constant 0 : index
    %c0_26 = arith.constant 0 : index
    %c0_27 = arith.constant 0 : index
    %c0_28 = arith.constant 0 : index
    %45 = vector.load %arg5[%c0_25, %c0_26, %c0_27, %c0_28] : memref<1x2x16x1xf32, #tpu.memory_space<vmem>>, vector<1x2x16x1xf32>
    %46 = vector.shape_cast %45 : vector<1x2x16x1xf32> to vector<2x16x1xf32>
    %cst_29 = arith.constant dense<0.000000e+00> : vector<2x16xf32>
    %47 = vector.multi_reduction <add>, %44, %cst_29 [2] : vector<2x16x128xf32> to vector<2x16xf32>
    %48 = vector.shape_cast %47 : vector<2x16xf32> to vector<2x16x1xf32>
    %49 = arith.addf %46, %48 : vector<2x16x1xf32>
    %c0_30 = arith.constant 0 : index
    %c0_31 = arith.constant 0 : index
    %c0_32 = arith.constant 0 : index
    %c0_33 = arith.constant 0 : index
    %50 = vector.load %arg5[%c0_30, %c0_31, %c0_32, %c0_33] : memref<1x2x16x1xf32, #tpu.memory_space<vmem>>, vector<1x2x16x1xf32>
    %51 = vector.shape_cast %50 : vector<1x2x16x1xf32> to vector<2x16x1xf32>
    %52 = vector.shape_cast %49 : vector<2x16x1xf32> to vector<1x2x16x1xf32>
    tpu.vector_store %arg5[%c0_30, %c0_31, %c0_32, %c0_33], %52 {strides = array<i32>} : memref<1x2x16x1xf32, #tpu.memory_space<vmem>>, vector<1x2x16x1xf32>,
    %c0_34 = arith.constant 0 : index
    %c0_35 = arith.constant 0 : index
    %c0_36 = arith.constant 0 : index
    %c0_37 = arith.constant 0 : index
    %53 = vector.load %arg4[%c0_34, %c0_35, %c0_36, %c0_37] : memref<1x2x16x32xf32, #tpu.memory_space<vmem>>, vector<1x1x16x32xf32>
    %54 = vector.shape_cast %53 : vector<1x1x16x32xf32> to vector<16x32xf32>
    %55 = vector.extract_strided_slice %44 {offsets = [0, 0, 0], sizes = [1, 16, 128], strides = [1, 1, 1]} : vector<2x16x128xf32> to vector<1x16x128xf32>
    %56 = vector.shape_cast %55 : vector<1x16x128xf32> to vector<16x128xf32>
    %c0_38 = arith.constant 0 : index
    %c0_39 = arith.constant 0 : index
    %c0_40 = arith.constant 0 : index
    %57 = vector.load %arg2[%c0_38, %c0_39, %c0_40] : memref<2x32x128xf32, #tpu.memory_space<vmem>>, vector<1x32x128xf32>
    %58 = vector.shape_cast %57 : vector<1x32x128xf32> to vector<32x128xf32>
    %cst_41 = arith.constant dense<0.000000e+00> : vector<16x32xf32>
    %59 = tpu.matmul %56, %58, %cst_41 {dimension_numbers = #tpu.dot_dimension_numbers<[1], [1], [0], [0], [0, 0, 1, 0], [], []>} : vector<16x128xf32>, vector<32x128xf32>, vector<16x32xf32> -> vector<16x32xf32>
    %60 = arith.addf %54, %59 : vector<16x32xf32>
    %c0_42 = arith.constant 0 : index
    %c0_43 = arith.constant 0 : index
    %c0_44 = arith.constant 0 : index
    %c0_45 = arith.constant 0 : index
    %61 = vector.load %arg4[%c0_42, %c0_43, %c0_44, %c0_45] : memref<1x2x16x32xf32, #tpu.memory_space<vmem>>, vector<1x1x16x32xf32>
    %62 = vector.shape_cast %61 : vector<1x1x16x32xf32> to vector<16x32xf32>
    %63 = vector.shape_cast %60 : vector<16x32xf32> to vector<1x1x16x32xf32>
    tpu.vector_store %arg4[%c0_42, %c0_43, %c0_44, %c0_45], %63 {strides = array<i32>} : memref<1x2x16x32xf32, #tpu.memory_space<vmem>>, vector<1x1x16x32xf32>,
    %c0_46 = arith.constant 0 : index
    %c1_47 = arith.constant 1 : index
    %c0_48 = arith.constant 0 : index
    %c0_49 = arith.constant 0 : index
    %64 = vector.load %arg4[%c0_46, %c1_47, %c0_48, %c0_49] : memref<1x2x16x32xf32, #tpu.memory_space<vmem>>, vector<1x1x16x32xf32>
    %65 = vector.shape_cast %64 : vector<1x1x16x32xf32> to vector<16x32xf32>
    %66 = vector.extract_strided_slice %44 {offsets = [1, 0, 0], sizes = [1, 16, 128], strides = [1, 1, 1]} : vector<2x16x128xf32> to vector<1x16x128xf32>
    %67 = vector.shape_cast %66 : vector<1x16x128xf32> to vector<16x128xf32>
    %c1_50 = arith.constant 1 : index
    %c0_51 = arith.constant 0 : index
    %c0_52 = arith.constant 0 : index
    %68 = vector.load %arg2[%c1_50, %c0_51, %c0_52] : memref<2x32x128xf32, #tpu.memory_space<vmem>>, vector<1x32x128xf32>
    %69 = vector.shape_cast %68 : vector<1x32x128xf32> to vector<32x128xf32>
    %cst_53 = arith.constant dense<0.000000e+00> : vector<16x32xf32>
    %70 = tpu.matmul %67, %69, %cst_53 {dimension_numbers = #tpu.dot_dimension_numbers<[1], [1], [0], [0], [0, 0, 1, 0], [], []>} : vector<16x128xf32>, vector<32x128xf32>, vector<16x32xf32> -> vector<16x32xf32>
    %71 = arith.addf %65, %70 : vector<16x32xf32>
    %c0_54 = arith.constant 0 : index
    %c1_55 = arith.constant 1 : index
    %c0_56 = arith.constant 0 : index
    %c0_57 = arith.constant 0 : index
    %72 = vector.load %arg4[%c0_54, %c1_55, %c0_56, %c0_57] : memref<1x2x16x32xf32, #tpu.memory_space<vmem>>, vector<1x1x16x32xf32>
    %73 = vector.shape_cast %72 : vector<1x1x16x32xf32> to vector<16x32xf32>
    %74 = vector.shape_cast %71 : vector<16x32xf32> to vector<1x1x16x32xf32>
    tpu.vector_store %arg4[%c0_54, %c1_55, %c0_56, %c0_57], %74 {strides = array<i32>} : memref<1x2x16x32xf32, #tpu.memory_space<vmem>>, vector<1x1x16x32xf32>,
    return
  }
  func.func @transform_0(%arg0: i32, %arg1: i32) -> (i32, i32, i32) {
    %c1_i32 = arith.constant 1 : i32
    %0 = arith.muli %arg0, %c1_i32 : i32
    %1 = arith.addi %0, %arg1 : i32
    %c0_i32 = arith.constant 0 : i32
    %c0_i32_0 = arith.constant 0 : i32
    %c0_i32_1 = arith.constant 0 : i32
    return %c0_i32, %c0_i32_0, %1 : i32, i32, i32
  }
  func.func @transform_1(%arg0: i32, %arg1: i32) -> (i32, i32) {
    %c0_i32 = arith.constant 0 : i32
    %c0_i32_0 = arith.constant 0 : i32
    %c0_i32_1 = arith.constant 0 : i32
    return %c0_i32, %c0_i32_0 : i32, i32
  }
  func.func @transform_2(%arg0: i32, %arg1: i32) -> (i32, i32, i32, i32) {
    %c0_i32 = arith.constant 0 : i32
    %c0_i32_0 = arith.constant 0 : i32
    %c0_i32_1 = arith.constant 0 : i32
    %c0_i32_2 = arith.constant 0 : i32
    return %arg0, %c0_i32, %c0_i32_0, %c0_i32_1 : i32, i32, i32, i32
  }
  func.func @transform_3(%arg0: i32, %arg1: i32) -> (i32, i32, i32, i32) {
    %c0_i32 = arith.constant 0 : i32
    %c0_i32_0 = arith.constant 0 : i32
    %c0_i32_1 = arith.constant 0 : i32
    %c0_i32_2 = arith.constant 0 : i32
    return %arg0, %c0_i32, %c0_i32_0, %c0_i32_1 : i32, i32, i32, i32
  }
}

</mosaic_0001>

<llo_original>
// kernel: tpu_custom_call.1
$region0: #{tpu_custom_call.1}
  #allocation0 [shape = 'u32[]', space=smem, size = 0x4, offset = 0x4, fixed_abs, tag = 'smem constant byte address 0x4 - core index']
  #allocation1 [shape = 'u32[144,128]{1,0:T(1,128)}', space=vmem, size = 0x12000, scoped, tag = 'internal scratch']
  #allocation2 [shape = 'f32[2,16,128]{2,1,0:T(8,128)}', space=vmem, size = 0x4000, scoped, tag = 'scratch operand']
  %s0 = inlined_call_operand.hbm [shape: f32[2,32,256], index: 0, kind: input, shape index: {}]
  %s1 = inlined_call_operand.hbm [shape: f32[16,32], index: 1, kind: input, shape index: {}]
  %s2 = inlined_call_operand.hbm [shape: f32[2,2,16,32], index: 2, kind: output, shape index: {0}]
  %s3 = inlined_call_operand.vmem [shape: f32[2,2,16,1], index: 3, kind: output, shape index: {1}]
  %4 = xla_tuple %s2, %s3
  %s5 = sld [smem:[#allocation0]]
  $region61: #{tpu_custom_call.1} parent=0
    _
  %s7 = ssub.s32 1, %s5
  %s8 = scalar_select 0, %s7, %s5
  $region1: #{tpu_custom_call.1} parent=0
    #allocation3 [shape = 'u8[65536]{0}', space=vmem, size = 0x10000, scoped, tag = 'input window, operand 0']
    #allocation4 [shape = 's32[2]{0}', space=sflag, size = 0x8, scoped, tag = 'scoped memory for tpu_custom_call.1']
    #allocation5 [shape = 's32[2]{0}', space=sflag, size = 0x8, scoped, tag = 'scoped memory for tpu_custom_call.1']
    #allocation6 [shape = 'u8[8192]{0}', space=vmem, size = 0x2000, scoped, tag = 'input window, operand 1, single buffered']
    #allocation7 [shape = 's32[1]{0}', space=sflag, size = 0x4, scoped, tag = 'scoped memory for tpu_custom_call.1']
    #allocation8 [shape = 'u8[32768]{0}', space=vmem, size = 0x8000, scoped, tag = 'output window, operand 0']
    %9 = vsyncpa [#allocation4], 0
    %s10 = scalar_lea.sflag [#allocation4], 1
    %11 = vsyncpa %s10, 0
    %12 = vsyncpa [#allocation7], 0
    %13 = vsyncpa [#allocation5], 0
    %s14 = scalar_lea.sflag [#allocation5], 1
    %15 = vsyncpa %s14, 0
    loop: start=0, step=1, limit=4
    $region2: #{tpu_custom_call.1} parent=1 // loop_pre_header
      _
    $region3: #{tpu_custom_call.1} parent=1 // loop_header
      %s17 = sphi 0, %s21
      %p18 = scmp.ge.s32.totalorder %s17, 4
      %s24 = sphi 0, %s36
      %s25 = sphi 0, %s32
      %s26 = sphi 0, %s24
      %s27 = sphi 0, %s25
      %s28 = sphi 0, %s26
      %s29 = sphi 0, %s27
      %s41 = sphi 0, %s43
      %s44 = sphi 0, %s41
      %s45 = sphi 0, %s44
      %s61 = sphi 0, %s45
      %s65 = sphi 0, %s65
      %s67 = sphi 0, %s65
      %s68 = sphi 0, %s67
      %s82 = sphi 0, %s68
      %s88 = sphi 0, %s90
      %s91 = sphi 0, %s88
      %s92 = sphi 0, %s91
      %s108 = sphi 0, %s92
      %s114 = sphi 0, %s116
      %s117 = sphi 0, %s114
      %s118 = sphi 0, %s117
      %s134 = sphi 0, %s118
    $region4: #{tpu_custom_call.1} parent=1 // loop_header_branch
      %20 = sbr.rel (%p18) target = $region8
    $region5: #{tpu_custom_call.1} parent=1 // loop_body
      %s22 = ssub.s32 %s17, 1
      %s23 = ssub.s32 %s17, 2
      %s30 = sadd.s32 1, %s25
      %p31 = scmp.ge.s32.totalorder %s30, 1
      %s32 = scalar_select %p31, 0, %s30
      %s33 = sadd.s32 1, %s24
      %s34 = scalar_select %p31, %s33, %s24
      %p35 = scmp.ge.s32.totalorder %s34, 2
      %s36 = scalar_select %p35, 0, %s34
      %s37 = sadd.s32 %s24, %s25
      %s38 = sadd.s32 %s36, %s32
      %s39 = ssub.s32 %s37, %s38
      %p40 = scmp.eq.s32.totalorder %s39, 0
      %s42 = sadd.s32 %s41, 1
      %s43 = scalar_select %p40, %s41, %s42
      %p46 = pneg %p40
      %p47 = scmp.eq.s32.totalorder %s17, 1
      %p48 = por %p46, %p47
      %p49 = scmp.ne.s32.totalorder %s41, %s44
      %p50 = scmp.eq.s32.totalorder %s17, 0
      %p51 = por %p49, %p50
      %p52 = scmp.ne.s32.totalorder %s41, %s44
      %p53 = scmp.eq.s32.totalorder %s22, 1
      %p54 = por %p52, %p53
      %p55 = scmp.ne.s32.totalorder %s44, %s45
      %p56 = scmp.eq.s32.totalorder %s22, 0
      %p57 = por %p55, %p56
      %p58 = scmp.ne.s32.totalorder %s44, %s45
      %p59 = scmp.eq.s32.totalorder %s23, 1
      %p60 = por %p58, %p59
      %p62 = scmp.ne.s32.totalorder %s45, %s61
      %p63 = scmp.eq.s32.totalorder %s23, 0
      %p64 = por %p62, %p63
      %s66 = sadd.s32 %s65, 1
      %p69 = scmp.eq.s32.totalorder %s17, 1
      %p70 = scmp.ne.s32.totalorder %s65, %s67
      %p71 = scmp.eq.s32.totalorder %s17, 0
      %p72 = por %p70, %p71
      %p73 = scmp.ne.s32.totalorder %s65, %s67
      %p74 = scmp.eq.s32.totalorder %s22, 1
      %p75 = por %p73, %p74
      %p76 = scmp.ne.s32.totalorder %s67, %s68
      %p77 = scmp.eq.s32.totalorder %s22, 0
      %p78 = por %p76, %p77
      %p79 = scmp.ne.s32.totalorder %s67, %s68
      %p80 = scmp.eq.s32.totalorder %s23, 1
      %p81 = por %p79, %p80
      %p83 = scmp.ne.s32.totalorder %s68, %s82
      %p84 = scmp.eq.s32.totalorder %s23, 0
      %p85 = por %p83, %p84
      %s86 = ssub.s32 %s24, %s36
      %p87 = scmp.eq.s32.totalorder %s86, 0
      %s89 = sadd.s32 %s88, 1
      %s90 = scalar_select %p87, %s88, %s89
      %p93 = pneg %p87
      %p94 = scmp.eq.s32.totalorder %s17, 1
      %p95 = por %p93, %p94
      %p96 = scmp.ne.s32.totalorder %s88, %s91
      %p97 = scmp.eq.s32.totalorder %s17, 0
      %p98 = por %p96, %p97
      %p99 = scmp.ne.s32.totalorder %s88, %s91
      %p100 = scmp.eq.s32.totalorder %s22, 1
      %p101 = por %p99, %p100
      %p102 = scmp.ne.s32.totalorder %s91, %s92
      %p103 = scmp.eq.s32.totalorder %s22, 0
      %p104 = por %p102, %p103
      %p105 = scmp.ne.s32.totalorder %s91, %s92
      %p106 = scmp.eq.s32.totalorder %s23, 1
      %p107 = por %p105, %p106
      %p109 = scmp.ne.s32.totalorder %s92, %s108
      %p110 = scmp.eq.s32.totalorder %s23, 0
      %p111 = por %p109, %p110
      %s112 = ssub.s32 %s24, %s36
      %p113 = scmp.eq.s32.totalorder %s112, 0
      %s115 = sadd.s32 %s114, 1
      %s116 = scalar_select %p113, %s114, %s115
      %p119 = pneg %p113
      %p120 = scmp.eq.s32.totalorder %s17, 1
      %p121 = por %p119, %p120
      %p122 = scmp.ne.s32.totalorder %s114, %s117
      %p123 = scmp.eq.s32.totalorder %s17, 0
      %p124 = por %p122, %p123
      %p125 = scmp.ne.s32.totalorder %s114, %s117
      %p126 = scmp.eq.s32.totalorder %s22, 1
      %p127 = por %p125, %p126
      %p128 = scmp.ne.s32.totalorder %s117, %s118
      %p129 = scmp.eq.s32.totalorder %s22, 0
      %p130 = por %p128, %p129
      %p131 = scmp.ne.s32.totalorder %s117, %s118
      %p132 = scmp.eq.s32.totalorder %s23, 1
      %p133 = por %p131, %p132
      %p135 = scmp.ne.s32.totalorder %s118, %s134
      %p136 = scmp.eq.s32.totalorder %s23, 0
      %p137 = por %p135, %p136
      %p138 = scmp.le.s32.totalorder 1, %s17
      %p139 = scmp.lt.s32.totalorder %s17, 3
      %p140 = pnand %p138, %p139
      %p141 = pneg %p140
      // Predicated region
      $region9: #{tpu_custom_call.1} parent=5 // pred_check
        _
      $region10: #{tpu_custom_call.1} parent=5 // pred_check_branch
        %143 = sbr.rel (%p140) target = $region12
      $region11: #{tpu_custom_call.1} parent=5 // pred_region
        %s144 = ssub.s32 %s17, 1
        // Predicated region
        $region13: #{tpu_custom_call.1} parent=11 // pred_check
          %p145 = pneg %p78
        $region14: #{tpu_custom_call.1} parent=11 // pred_check_branch
          %147 = sbr.rel (%p145) target = $region16
        $region15: #{tpu_custom_call.1} parent=11 // pred_region
          %s149 = ssub.s32 256, 256
          %150 = vsyncadd [#allocation7], %s149
          %s151 = sshll.u32 [#allocation6], 4
          %s152 = int_to_ptr.vmem [resolvable:$true] %s151
          %157 = dma.hbm_to_vmem [thread:$0]  %s1, 256, %s152, [#allocation7], 128, 128, 8
        $region16: #{tpu_custom_call.1} parent=11 // pred_fallthru
          _
      $region12: #{tpu_custom_call.1} parent=5 // pred_fallthru
        _
      %p158 = scmp.lt.s32.totalorder %s17, 2
      // Predicated region
      $region17: #{tpu_custom_call.1} parent=5 // pred_check
        %p159 = pneg %p158
      $region18: #{tpu_custom_call.1} parent=5 // pred_check_branch
        %161 = sbr.rel (%p159) target = $region20
      $region19: #{tpu_custom_call.1} parent=5 // pred_region
        // Predicated region
        $region21: #{tpu_custom_call.1} parent=19 // pred_check
          %p162 = pneg %p51
        $region22: #{tpu_custom_call.1} parent=19 // pred_check_branch
          %164 = sbr.rel (%p162) target = $region24
        $region23: #{tpu_custom_call.1} parent=19 // pred_region
          %s165 = sand.u32 %s41, 1
          %s166 = scalar_lea.sflag [#allocation4], %s165
          %s167 = sand.u32 %s41, 1
          %s168 = smul.addr %s167, 64
          %s169 = scalar_lea.vmem [#allocation3], %s168
          %s170 = sadd.s32 %s24, %s25
          %s172 = ssub.s32 1024, 1024
          %173 = vsyncadd %s166, %s172
          %s174 = smul.addr %s170, 128
          %s175 = scalar_lea.hbm %s0, %s174
          %s176 = sshll.u32 %s169, 4
          %s177 = int_to_ptr.vmem [resolvable:$true] %s176
          %182 = dma.hbm_to_vmem [thread:$0]  %s175, 1024, %s177, %s166, 256, 128, 8
        $region24: #{tpu_custom_call.1} parent=19 // pred_fallthru
          _
      $region20: #{tpu_custom_call.1} parent=5 // pred_fallthru
        _
      %p183 = scmp.le.s32.totalorder 1, %s17
      %p184 = scmp.lt.s32.totalorder %s17, 3
      %p185 = pnand %p183, %p184
      %p186 = pneg %p185
      // Predicated region
      $region25: #{tpu_custom_call.1} parent=5 // pred_check
        _
      $region26: #{tpu_custom_call.1} parent=5 // pred_check_branch
        %188 = sbr.rel (%p185) target = $region28
      $region27: #{tpu_custom_call.1} parent=5 // pred_region
        %s189 = ssub.s32 %s17, 1
        %s190 = sand.u32 %s44, 1
        %s191 = scalar_lea.sflag [#allocation4], %s190
        %s192 = sand.u32 %s44, 1
        %s193 = smul.addr %s192, 64
        %s194 = scalar_lea.vmem [#allocation3], %s193
        // Predicated region
        $region29: #{tpu_custom_call.1} parent=27 // pred_check
          %p195 = pneg %p57
        $region30: #{tpu_custom_call.1} parent=27 // pred_check_branch
          %197 = sbr.rel (%p195) target = $region32
        $region31: #{tpu_custom_call.1} parent=27 // pred_region
          %198 = dma.done %s191, 1024
        $region32: #{tpu_custom_call.1} parent=27 // pred_fallthru
          _
        // Predicated region
        $region33: #{tpu_custom_call.1} parent=27 // pred_check
          %p199 = pneg %p78
        $region34: #{tpu_custom_call.1} parent=27 // pred_check_branch
          %201 = sbr.rel (%p199) target = $region36
        $region35: #{tpu_custom_call.1} parent=27 // pred_region
          %202 = dma.done [#allocation7], 256
        $region36: #{tpu_custom_call.1} parent=27 // pred_fallthru
          _
        %s203 = sand.u32 %s44, 1
        %s204 = scalar_lea.sflag [#allocation4], %s203
        %s205 = sand.u32 %s44, 1
        %s206 = smul.addr %s205, 64
        %s207 = scalar_lea.vmem [#allocation3], %s206
        %p208 = pneg %p57
        %p209 = pneg %p54
        %p210 = pneg %p78
        %p211 = pneg %p75
        %p212 = pneg %p104
        %p213 = pneg %p101
        %s214 = sand.u32 %s91, 1
        %s215 = scalar_lea.sflag [#allocation5], %s214
        %s216 = sand.u32 %s91, 1
        %s217 = smul.addr %s216, 32
        %s218 = scalar_lea.vmem [#allocation8], %s217
        %p219 = pneg %p130
        %p220 = pneg %p127
        %p221 = scmp.lt.s32.totalorder %s26, 1
        %s222 = scalar_select %p221, %s26, 1
        %s223 = smul.addr %s222, 4
        %s224 = smul.addr %s223, 8
        %s225 = scalar_lea.vmem %s3, %s224
        %s226 = sadd.s32 %s26, %s27
        %p227 = scmp.lt.s32.totalorder %s26, 1
        %s228 = scalar_select %p227, %s26, 1
        %s229 = smul.addr %s228, 4
        %s230 = smul.addr %s229, 8
        %s231 = scalar_lea.vmem %s3, %s230
        %p232 = scmp.eq.s32.totalorder %s27, 0
        // Predicated region
        $region37: #{tpu_custom_call.1} parent=27 // pred_check
          %p233 = pneg %p232
        $region38: #{tpu_custom_call.1} parent=27 // pred_check_branch
          %235 = sbr.rel (%p233) target = $region40
        $region39: #{tpu_custom_call.1} parent=27 // pred_region
          %vm236 = vcmask 261120
          %237 = vst.msk [vmem:[%s218] sm:$0xff] %vm236, 0.0
          %238 = vst.msk [vmem:[%s218 + $0x8] sm:$0xff] %vm236, 0.0
          %239 = vst.msk [vmem:[%s218 + $0x10] sm:$0xff] %vm236, 0.0
          %240 = vst.msk [vmem:[%s218 + $0x18] sm:$0xff] %vm236, 0.0
          %vm241 = vcmask 7168
          %242 = vst.msk [vmem:[%s231] sm:$0xff] %vm241, 0.0
          %243 = vst.msk [vmem:[%s231 + $0x8] sm:$0xff] %vm241, 0.0
          %244 = vst.msk [vmem:[%s231 + $0x10] sm:$0xff] %vm241, 0.0
          %245 = vst.msk [vmem:[%s231 + $0x18] sm:$0xff] %vm241, 0.0
        $region40: #{tpu_custom_call.1} parent=27 // pred_fallthru
          _
        %v246 = vld [vmem:[#allocation6] sm:$0xff]
        %v247 = vld [vmem:[#allocation6 + $0x8] sm:$0xff]
        %v248 = vld [vmem:[%s194] sm:$0xff]
        %v249 = vld [vmem:[%s194 + $0x8] sm:$0xff]
        %v250 = vld [vmem:[%s194 + $0x10] sm:$0xff]
        %v251 = vld [vmem:[%s194 + $0x18] sm:$0xff]
        %vm252 = vcmask 261120
        %v254 = vsel %vm252, %v246, 0
        %v257 = vsel %vm252, %v247, 0
        %259 = vmatprep.subr.mxu0 0.0
        %260 = vmatpush1.msra.mxu0 %v248
        %261 = vmatprep.subr.mxu0 0.0
        %262 = vmatpush1.msra.mxu0 %v249
        %263 = vmatprep.subr.mxu0 0.0
        %264 = vmatpush1.msra.mxu0 %v250
        %265 = vmatprep.subr.mxu0 0.0
        %266 = vmatpush1.msra.mxu0 %v251
        %267 = vmatprep.subr.mxu0 0.0
        %268 = vmatpush1.msra.mxu0 0.0
        %269 = vmatprep.subr.mxu0 0.0
        %270 = vmatpush1.msra.mxu0 0.0
        %271 = vmatprep.subr.mxu0 0.0
        %272 = vmatpush1.msra.mxu0 0.0
        %273 = vmatprep.subr.mxu0 0.0
        %274 = vmatpush1.msra.mxu0 0.0
        %275 = vmatprep.subr.mxu0 0.0
        %276 = vmatpush1.msra.mxu0 0.0
        %277 = vmatprep.subr.mxu0 0.0
        %278 = vmatpush1.msra.mxu0 0.0
        %279 = vmatprep.subr.mxu0 0.0
        %280 = vmatpush1.msra.mxu0 0.0
        %281 = vmatprep.subr.mxu0 0.0
        %282 = vmatpush1.msra.mxu0 0.0
        %283 = vmatprep.subr.mxu0 0.0
        %284 = vmatpush1.msra.mxu0 0.0
        %285 = vmatprep.subr.mxu0 0.0
        %286 = vmatpush1.msra.mxu0 0.0
        %287 = vmatprep.subr.mxu0 0.0
        %288 = vmatpush1.msra.mxu0 0.0
        %289 = vmatprep.subr.mxu0 0.0
        %290 = vmatpush1.msra.mxu0 0.0
        %291 = vmatprep.subr.mxu0 0.0
        %292 = vmatpush1.msra.mxu0 0.0
        %293 = vmatprep.subr.mxu0 0.0
        %294 = vmatpush1.msra.mxu0 0.0
        %295 = vmatprep.subr.mxu0 0.0
        %296 = vmatpush1.msra.mxu0 0.0
        %297 = vmatprep.subr.mxu0 0.0
        %298 = vmatpush1.msra.mxu0 0.0
        %299 = vmatprep.subr.mxu0 0.0
        %300 = vmatpush1.msra.mxu0 0.0
        %301 = vmatprep.subr.mxu0 0.0
        %302 = vmatpush1.msra.mxu0 0.0
        %303 = vmatprep.subr.mxu0 0.0
        %304 = vmatpush1.msra.mxu0 0.0
        %305 = vmatprep.subr.mxu0 0.0
        %306 = vmatpush1.msra.mxu0 0.0
        %307 = vmatprep.subr.mxu0 0.0
        %308 = vmatpush1.msra.mxu0 0.0
        %309 = vmatprep.subr.mxu0 0.0
        %310 = vmatpush1.msra.mxu0 0.0
        %311 = vmatprep.subr.mxu0 0.0
        %312 = vmatpush1.msra.mxu0 0.0
        %313 = vmatprep.subr.mxu0 0.0
        %314 = vmatpush1.msra.mxu0 0.0
        %315 = vmatprep.subr.mxu0 0.0
        %316 = vmatpush1.msra.mxu0 0.0
        %317 = vmatprep.subr.mxu0 0.0
        %318 = vmatpush1.msra.mxu0 0.0
        %319 = vmatprep.subr.mxu0 0.0
        %320 = vmatpush1.msra.mxu0 0.0
        %321 = vmatprep.subr.mxu0 0.0
        %322 = vmatpush1.msra.mxu0 0.0
        %323 = vmatprep.mubr.f32.mxu0 0.0
        %324 = vmatmul.mubr.f32.gmra.mrb[0].mxu0 %v254
        %v325 = vpop.f32.mrb[0].mxu0
        %v326 = vadd.f32 0.0, %v325
        %v327 = vpop.f32.mrb[0].mxu0
        %328 = vmatprep.mubr.f32.mxu0 0.0
        %329 = vmatmul.mubr.f32.gmra.mrb[0].mxu0 %v257
        %v330 = vpop.f32.mrb[0].mxu0
        %v331 = vadd.f32 0.0, %v330
        %v332 = vpop.f32.mrb[0].mxu0
        %333 = vdwg.mxu0
        %334 = vst [vmem:[#allocation2] sm:$0xff] %v326
        %335 = vst [vmem:[#allocation2 + $0x8] sm:$0xff] %v331
        %s336 = scalar_lea.vmem %s194, 32 [#allocation3]
        %v337 = vld [vmem:[%s336] sm:$0xff]
        %v338 = vld [vmem:[%s336 + $0x8] sm:$0xff]
        %v339 = vld [vmem:[%s336 + $0x10] sm:$0xff]
        %v340 = vld [vmem:[%s336 + $0x18] sm:$0xff]
        %341 = vmatprep.subr.mxu0 0.0
        %342 = vmatpush1.msra.mxu0 %v337
        %343 = vmatprep.subr.mxu0 0.0
        %344 = vmatpush1.msra.mxu0 %v338
        %345 = vmatprep.subr.mxu0 0.0
        %346 = vmatpush1.msra.mxu0 %v339
        %347 = vmatprep.subr.mxu0 0.0
        %348 = vmatpush1.msra.mxu0 %v340
        %349 = vmatprep.subr.mxu0 0.0
        %350 = vmatpush1.msra.mxu0 0.0
        %351 = vmatprep.subr.mxu0 0.0
        %352 = vmatpush1.msra.mxu0 0.0
        %353 = vmatprep.subr.mxu0 0.0
        %354 = vmatpush1.msra.mxu0 0.0
        %355 = vmatprep.subr.mxu0 0.0
        %356 = vmatpush1.msra.mxu0 0.0
        %357 = vmatprep.subr.mxu0 0.0
        %358 = vmatpush1.msra.mxu0 0.0
        %359 = vmatprep.subr.mxu0 0.0
        %360 = vmatpush1.msra.mxu0 0.0
        %361 = vmatprep.subr.mxu0 0.0
        %362 = vmatpush1.msra.mxu0 0.0
        %363 = vmatprep.subr.mxu0 0.0
        %364 = vmatpush1.msra.mxu0 0.0
        %365 = vmatprep.subr.mxu0 0.0
        %366 = vmatpush1.msra.mxu0 0.0
        %367 = vmatprep.subr.mxu0 0.0
        %368 = vmatpush1.msra.mxu0 0.0
        %369 = vmatprep.subr.mxu0 0.0
        %370 = vmatpush1.msra.mxu0 0.0
        %371 = vmatprep.subr.mxu0 0.0
        %372 = vmatpush1.msra.mxu0 0.0
        %373 = vmatprep.subr.mxu0 0.0
        %374 = vmatpush1.msra.mxu0 0.0
        %375 = vmatprep.subr.mxu0 0.0
        %376 = vmatpush1.msra.mxu0 0.0
        %377 = vmatprep.subr.mxu0 0.0
        %378 = vmatpush1.msra.mxu0 0.0
        %379 = vmatprep.subr.mxu0 0.0
        %380 = vmatpush1.msra.mxu0 0.0
        %381 = vmatprep.subr.mxu0 0.0
        %382 = vmatpush1.msra.mxu0 0.0
        %383 = vmatprep.subr.mxu0 0.0
        %384 = vmatpush1.msra.mxu0 0.0
        %385 = vmatprep.subr.mxu0 0.0
        %386 = vmatpush1.msra.mxu0 0.0
        %387 = vmatprep.subr.mxu0 0.0
        %388 = vmatpush1.msra.mxu0 0.0
        %389 = vmatprep.subr.mxu0 0.0
        %390 = vmatpush1.msra.mxu0 0.0
        %391 = vmatprep.subr.mxu0 0.0
        %392 = vmatpush1.msra.mxu0 0.0
        %393 = vmatprep.subr.mxu0 0.0
        %394 = vmatpush1.msra.mxu0 0.0
        %395 = vmatprep.subr.mxu0 0.0
        %396 = vmatpush1.msra.mxu0 0.0
        %397 = vmatprep.subr.mxu0 0.0
        %398 = vmatpush1.msra.mxu0 0.0
        %399 = vmatprep.subr.mxu0 0.0
        %400 = vmatpush1.msra.mxu0 0.0
        %401 = vmatprep.subr.mxu0 0.0
        %402 = vmatpush1.msra.mxu0 0.0
        %403 = vmatprep.subr.mxu0 0.0
        %404 = vmatpush1.msra.mxu0 0.0
        %405 = vmatprep.mubr.f32.mxu0 0.0
        %406 = vmatmul.mubr.f32.gmra.mrb[0].mxu0 %v254
        %v407 = vpop.f32.mrb[0].mxu0
        %v408 = vadd.f32 0.0, %v407
        %v409 = vpop.f32.mrb[0].mxu0
        %410 = vmatprep.mubr.f32.mxu0 0.0
        %411 = vmatmul.mubr.f32.gmra.mrb[0].mxu0 %v257
        %v412 = vpop.f32.mrb[0].mxu0
        %v413 = vadd.f32 0.0, %v412
        %v414 = vpop.f32.mrb[0].mxu0
        %415 = vdwg.mxu0
        %s416 = scalar_lea.vmem [#allocation2], 16
        %417 = vst [vmem:[%s416] sm:$0xff] %v408
        %418 = vst [vmem:[%s416 + $0x8] sm:$0xff] %v413
        %v419 = vld [vmem:[#allocation2] sm:$0xff]
        %v420 = vld [vmem:[#allocation2 + $0x8] sm:$0xff]
        %v421 = vld [vmem:[#allocation2 + $0x10] sm:$0xff]
        %v422 = vld [vmem:[#allocation2 + $0x18] sm:$0xff]
        %v423 = vadd.f32 %v419, %v420
        %v424 = vadd.f32 %v423, %v421
        %v425 = vadd.f32 %v424, %v422
        %v426 = vrot.slane %v425, 4
        %v427 = vadd.f32 %v425, %v426
        %v428 = vrot.slane %v427, 2
        %v429 = vadd.f32 %v427, %v428
        %v430 = vrot.slane %v429, 1
        %v431 = vadd.f32 %v429, %v430
        %v432 = vmul.f32 %v431, 0.03125
        %v433 = vmul.f32 %v419, %v419
        %v434 = vmul.f32 %v420, %v420
        %v435 = vmul.f32 %v421, %v421
        %v436 = vmul.f32 %v422, %v422
        %v437 = vadd.f32 %v433, %v434
        %v438 = vadd.f32 %v437, %v435
        %v439 = vadd.f32 %v438, %v436
        %v440 = vrot.slane %v439, 4
        %v441 = vadd.f32 %v439, %v440
        %v442 = vrot.slane %v441, 2
        %v443 = vadd.f32 %v441, %v442
        %v444 = vrot.slane %v443, 1
        %v445 = vadd.f32 %v443, %v444
        %v446 = vmul.f32 %v445, 0.03125
        %v447 = vmul.f32 %v432, %v432
        %v448 = vsub.f32 %v446, %v447
        %v449 = vmax.f32 %v448, 0.0
        %v450 = vadd.f32 %v449, 1e-05
        %v451 = vrsqrt.pop %v450
        %v452 = vmul.f32 %v419, %v451
        %v453 = vmul.f32 %v420, %v451
        %v454 = vmul.f32 %v421, %v451
        %v455 = vmul.f32 %v422, %v451
        %v456 = vmax.f32 %v452, %v453
        %v457 = vrot.slane %v456, 4
        %v458 = vmax.f32 %v456, %v457
        %v459 = vrot.slane %v458, 2
        %v460 = vmax.f32 %v458, %v459
        %v461 = vrot.slane %v460, 1
        %v462 = vmax.f32 %v460, %v461
        %v463 = vmax.f32 %v454, %v455
        %v464 = vrot.slane %v463, 4
        %v465 = vmax.f32 %v463, %v464
        %v466 = vrot.slane %v465, 2
        %v467 = vmax.f32 %v465, %v466
        %v468 = vrot.slane %v467, 1
        %v469 = vmax.f32 %v467, %v468
        %v470 = vsub.f32 %v452, %v462
        %v471 = vsub.f32 %v453, %v462
        %v472 = vsub.f32 %v454, %v469
        %v473 = vsub.f32 %v455, %v469
        %v474 = vmul.f32 %v470, 1.442695
        %v475 = vpow.pop %v474
        %v476 = vmul.f32 %v471, 1.442695
        %v477 = vpow.pop %v476
        %v478 = vmul.f32 %v472, 1.442695
        %v479 = vpow.pop %v478
        %v480 = vmul.f32 %v473, 1.442695
        %v481 = vpow.pop %v480
        %v482 = vadd.f32 %v475, %v477
        %v483 = vrot.slane %v482, 4
        %v484 = vadd.f32 %v482, %v483
        %v485 = vrot.slane %v484, 2
        %v486 = vadd.f32 %v484, %v485
        %v487 = vrot.slane %v486, 1
        %v488 = vadd.f32 %v486, %v487
        %v489 = vadd.f32 %v479, %v481
        %v490 = vrot.slane %v489, 4
        %v491 = vadd.f32 %v489, %v490
        %v492 = vrot.slane %v491, 2
        %v493 = vadd.f32 %v491, %v492
        %v494 = vrot.slane %v493, 1
        %v495 = vadd.f32 %v493, %v494
        %v496 = vrcp.pop %v488
        %v497 = vrcp.pop %v495
        %v498 = vmul.f32 %v475, %v496
        %v499 = vmul.f32 %v477, %v496
        %v500 = vmul.f32 %v479, %v497
        %v501 = vmul.f32 %v481, %v497
        %v502 = vld [vmem:[%s231] sm:$0xff]
        %v503 = vld [vmem:[%s231 + $0x8] sm:$0xff]
        %v504 = vld [vmem:[%s231 + $0x10] sm:$0xff]
        %v505 = vld [vmem:[%s231 + $0x18] sm:$0xff]
        %506 = vadd.xlane.f32.xlu0 %v498
        %v507 = vpop.xlane.xlu0 %506
        %508 = vadd.xlane.f32.xlu0 %v499
        %v509 = vpop.xlane.xlu0 %508
        %510 = vadd.xlane.f32.xlu0 %v500
        %v511 = vpop.xlane.xlu0 %510
        %512 = vadd.xlane.f32.xlu0 %v501
        %v513 = vpop.xlane.xlu0 %512
        %v514 = vadd.f32 %v502, %v507
        %v515 = vadd.f32 %v503, %v509
        %v516 = vadd.f32 %v504, %v511
        %v517 = vadd.f32 %v505, %v513
        %vm518 = vcmask 7168
        %519 = vst.msk [vmem:[%s231] sm:$0xff] %vm518, %v514
        %520 = vst.msk [vmem:[%s231 + $0x8] sm:$0xff] %vm518, %v515
        %521 = vst.msk [vmem:[%s231 + $0x10] sm:$0xff] %vm518, %v516
        %522 = vst.msk [vmem:[%s231 + $0x18] sm:$0xff] %vm518, %v517
        %v523 = vld [vmem:[%s218] sm:$0xff]
        %v524 = vld [vmem:[%s218 + $0x8] sm:$0xff]
        %v525 = vld [vmem:[%s194] sm:$0xff]
        %v526 = vld [vmem:[%s194 + $0x8] sm:$0xff]
        %v527 = vld [vmem:[%s194 + $0x10] sm:$0xff]
        %v528 = vld [vmem:[%s194 + $0x18] sm:$0xff]
        %529 = vmatprep.subr.mxu0 0.0
        %530 = vmatpush1.xpose.msra.mxu0 %v525
        %531 = vmatprep.subr.mxu0 0.0
        %532 = vmatpush1.xpose.msra.mxu0 %v526
        %533 = vmatprep.subr.mxu0 0.0
        %534 = vmatpush1.xpose.msra.mxu0 %v527
        %535 = vmatprep.subr.mxu0 0.0
        %536 = vmatpush1.xpose.msra.mxu0 %v528
        %537 = vmatprep.subr.mxu0 0.0
        %538 = vmatpush1.xpose.msra.mxu0 0.0
        %539 = vmatprep.subr.mxu0 0.0
        %540 = vmatpush1.xpose.msra.mxu0 0.0
        %541 = vmatprep.subr.mxu0 0.0
        %542 = vmatpush1.xpose.msra.mxu0 0.0
        %543 = vmatprep.subr.mxu0 0.0
        %544 = vmatpush1.xpose.msra.mxu0 0.0
        %545 = vmatprep.subr.mxu0 0.0
        %546 = vmatpush1.xpose.msra.mxu0 0.0
        %547 = vmatprep.subr.mxu0 0.0
        %548 = vmatpush1.xpose.msra.mxu0 0.0
        %549 = vmatprep.subr.mxu0 0.0
        %550 = vmatpush1.xpose.msra.mxu0 0.0
        %551 = vmatprep.subr.mxu0 0.0
        %552 = vmatpush1.xpose.msra.mxu0 0.0
        %553 = vmatprep.subr.mxu0 0.0
        %554 = vmatpush1.xpose.msra.mxu0 0.0
        %555 = vmatprep.subr.mxu0 0.0
        %556 = vmatpush1.xpose.msra.mxu0 0.0
        %557 = vmatprep.subr.mxu0 0.0
        %558 = vmatpush1.xpose.msra.mxu0 0.0
        %559 = vmatprep.subr.mxu0 0.0
        %560 = vmatpush1.xpose.msra.mxu0 0.0
        %561 = vmatprep.subr.mxu0 0.0
        %562 = vmatpush1.xpose.msra.mxu0 0.0
        %563 = vmatprep.subr.mxu0 0.0
        %564 = vmatpush1.xpose.msra.mxu0 0.0
        %565 = vmatprep.subr.mxu0 0.0
        %566 = vmatpush1.xpose.msra.mxu0 0.0
        %567 = vmatprep.subr.mxu0 0.0
        %568 = vmatpush1.xpose.msra.mxu0 0.0
        %569 = vmatprep.subr.mxu0 0.0
        %570 = vmatpush1.xpose.msra.mxu0 0.0
        %571 = vmatprep.subr.mxu0 0.0
        %572 = vmatpush1.xpose.msra.mxu0 0.0
        %573 = vmatprep.subr.mxu0 0.0
        %574 = vmatpush1.xpose.msra.mxu0 0.0
        %575 = vmatprep.subr.mxu0 0.0
        %576 = vmatpush1.xpose.msra.mxu0 0.0
        %577 = vmatprep.subr.mxu0 0.0
        %578 = vmatpush1.xpose.msra.mxu0 0.0
        %579 = vmatprep.subr.mxu0 0.0
        %580 = vmatpush1.xpose.msra.mxu0 0.0
        %581 = vmatprep.subr.mxu0 0.0
        %582 = vmatpush1.xpose.msra.mxu0 0.0
        %583 = vmatprep.subr.mxu0 0.0
        %584 = vmatpush1.xpose.msra.mxu0 0.0
        %585 = vmatprep.subr.mxu0 0.0
        %586 = vmatpush1.xpose.msra.mxu0 0.0
        %587 = vmatprep.subr.mxu0 0.0
        %588 = vmatpush1.xpose.msra.mxu0 0.0
        %589 = vmatprep.subr.mxu0 0.0
        %590 = vmatpush1.xpose.msra.mxu0 0.0
        %591 = vmatprep.subr.mxu0 0.0
        %592 = vmatpush1.xpose.msra.mxu0 0.0
        %593 = vmatprep.mubr.f32.mxu0 0.0
        %594 = vmatmul.mubr.f32.gmra.mrb[0].mxu0 %v498
        %v595 = vpop.f32.mrb[0].mxu0
        %v596 = vadd.f32 0.0, %v595
        %v597 = vpop.f32.mrb[0].mxu0
        %598 = vmatprep.mubr.f32.mxu0 0.0
        %599 = vmatmul.mubr.f32.gmra.mrb[0].mxu0 %v499
        %v600 = vpop.f32.mrb[0].mxu0
        %v601 = vadd.f32 0.0, %v600
        %v602 = vpop.f32.mrb[0].mxu0
        %603 = vdwg.mxu0
        %v604 = vadd.f32 %v523, %v596
        %v605 = vadd.f32 %v524, %v601
        %606 = vst.msk [vmem:[%s218] sm:$0xff] %vm252, %v604
        %607 = vst.msk [vmem:[%s218 + $0x8] sm:$0xff] %vm252, %v605
        %s608 = scalar_lea.vmem %s218, 16 [#allocation8]
        %v609 = vld [vmem:[%s608] sm:$0xff]
        %v610 = vld [vmem:[%s608 + $0x8] sm:$0xff]
        %v611 = vld [vmem:[%s336] sm:$0xff]
        %v612 = vld [vmem:[%s336 + $0x8] sm:$0xff]
        %v613 = vld [vmem:[%s336 + $0x10] sm:$0xff]
        %v614 = vld [vmem:[%s336 + $0x18] sm:$0xff]
        %615 = vmatprep.subr.mxu0 0.0
        %616 = vmatpush1.xpose.msra.mxu0 %v611
        %617 = vmatprep.subr.mxu0 0.0
        %618 = vmatpush1.xpose.msra.mxu0 %v612
        %619 = vmatprep.subr.mxu0 0.0
        %620 = vmatpush1.xpose.msra.mxu0 %v613
        %621 = vmatprep.subr.mxu0 0.0
        %622 = vmatpush1.xpose.msra.mxu0 %v614
        %623 = vmatprep.subr.mxu0 0.0
        %624 = vmatpush1.xpose.msra.mxu0 0.0
        %625 = vmatprep.subr.mxu0 0.0
        %626 = vmatpush1.xpose.msra.mxu0 0.0
        %627 = vmatprep.subr.mxu0 0.0
        %628 = vmatpush1.xpose.msra.mxu0 0.0
        %629 = vmatprep.subr.mxu0 0.0
        %630 = vmatpush1.xpose.msra.mxu0 0.0
        %631 = vmatprep.subr.mxu0 0.0
        %632 = vmatpush1.xpose.msra.mxu0 0.0
        %633 = vmatprep.subr.mxu0 0.0
        %634 = vmatpush1.xpose.msra.mxu0 0.0
        %635 = vmatprep.subr.mxu0 0.0
        %636 = vmatpush1.xpose.msra.mxu0 0.0
        %637 = vmatprep.subr.mxu0 0.0
        %638 = vmatpush1.xpose.msra.mxu0 0.0
        %639 = vmatprep.subr.mxu0 0.0
        %640 = vmatpush1.xpose.msra.mxu0 0.0
        %641 = vmatprep.subr.mxu0 0.0
        %642 = vmatpush1.xpose.msra.mxu0 0.0
        %643 = vmatprep.subr.mxu0 0.0
        %644 = vmatpush1.xpose.msra.mxu0 0.0
        %645 = vmatprep.subr.mxu0 0.0
        %646 = vmatpush1.xpose.msra.mxu0 0.0
        %647 = vmatprep.subr.mxu0 0.0
        %648 = vmatpush1.xpose.msra.mxu0 0.0
        %649 = vmatprep.subr.mxu0 0.0
        %650 = vmatpush1.xpose.msra.mxu0 0.0
        %651 = vmatprep.subr.mxu0 0.0
        %652 = vmatpush1.xpose.msra.mxu0 0.0
        %653 = vmatprep.subr.mxu0 0.0
        %654 = vmatpush1.xpose.msra.mxu0 0.0
        %655 = vmatprep.subr.mxu0 0.0
        %656 = vmatpush1.xpose.msra.mxu0 0.0
        %657 = vmatprep.subr.mxu0 0.0
        %658 = vmatpush1.xpose.msra.mxu0 0.0
        %659 = vmatprep.subr.mxu0 0.0
        %660 = vmatpush1.xpose.msra.mxu0 0.0
        %661 = vmatprep.subr.mxu0 0.0
        %662 = vmatpush1.xpose.msra.mxu0 0.0
        %663 = vmatprep.subr.mxu0 0.0
        %664 = vmatpush1.xpose.msra.mxu0 0.0
        %665 = vmatprep.subr.mxu0 0.0
        %666 = vmatpush1.xpose.msra.mxu0 0.0
        %667 = vmatprep.subr.mxu0 0.0
        %668 = vmatpush1.xpose.msra.mxu0 0.0
        %669 = vmatprep.subr.mxu0 0.0
        %670 = vmatpush1.xpose.msra.mxu0 0.0
        %671 = vmatprep.subr.mxu0 0.0
        %672 = vmatpush1.xpose.msra.mxu0 0.0
        %673 = vmatprep.subr.mxu0 0.0
        %674 = vmatpush1.xpose.msra.mxu0 0.0
        %675 = vmatprep.subr.mxu0 0.0
        %676 = vmatpush1.xpose.msra.mxu0 0.0
        %677 = vmatprep.subr.mxu0 0.0
        %678 = vmatpush1.xpose.msra.mxu0 0.0
        %679 = vmatprep.mubr.f32.mxu0 0.0
        %680 = vmatmul.mubr.f32.gmra.mrb[0].mxu0 %v500
        %v681 = vpop.f32.mrb[0].mxu0
        %v682 = vadd.f32 0.0, %v681
        %v683 = vpop.f32.mrb[0].mxu0
        %684 = vmatprep.mubr.f32.mxu0 0.0
        %685 = vmatmul.mubr.f32.gmra.mrb[0].mxu0 %v501
        %v686 = vpop.f32.mrb[0].mxu0
        %v687 = vadd.f32 0.0, %v686
        %v688 = vpop.f32.mrb[0].mxu0
        %689 = vdwg.mxu0
        %v690 = vadd.f32 %v609, %v682
        %v691 = vadd.f32 %v610, %v687
        %692 = vst.msk [vmem:[%s608] sm:$0xff] %vm252, %v690
        %693 = vst.msk [vmem:[%s608 + $0x8] sm:$0xff] %vm252, %v691
        %s694 = sand.u32 %s91, 1
        %s695 = scalar_lea.sflag [#allocation5], %s694
        %s696 = sand.u32 %s91, 1
        %s697 = smul.addr %s696, 32
        %s698 = scalar_lea.vmem [#allocation8], %s697
        %p699 = scmp.lt.s32.totalorder %s26, 1
        %s700 = scalar_select %p699, %s26, 1
        %s701 = smul.addr %s700, 4
        %s702 = smul.addr %s701, 8
        %s703 = scalar_lea.vmem %s3, %s702
        // Predicated region
        $region41: #{tpu_custom_call.1} parent=27 // pred_check
          %p704 = pneg %p101
        $region42: #{tpu_custom_call.1} parent=27 // pred_check_branch
          %706 = sbr.rel (%p704) target = $region44
        $region43: #{tpu_custom_call.1} parent=27 // pred_region
          %s708 = ssub.s32 512, 512
          %709 = vsyncadd %s695, %s708
          %s710 = smul.addr %s26, 4
          %s711 = smul.addr %s710, 128
          %s712 = scalar_lea.hbm %s2, %s711
          %s713 = sshll.u32 %s698, 4
          %s714 = int_to_ptr.vmem [resolvable:$true] %s713
          %719 = dma.vmem_to_hbm [thread:$0]  %s714, 512, %s712, %s695, 128, 128, 8
        $region44: #{tpu_custom_call.1} parent=27 // pred_fallthru
          _
        // Predicated region
        $region45: #{tpu_custom_call.1} parent=27 // pred_check
          %p720 = pneg %p127
        $region46: #{tpu_custom_call.1} parent=27 // pred_check_branch
          %722 = sbr.rel (%p720) target = $region48
        $region47: #{tpu_custom_call.1} parent=27 // pred_region
          _
        $region48: #{tpu_custom_call.1} parent=27 // pred_fallthru
          _
      $region28: #{tpu_custom_call.1} parent=5 // pred_fallthru
        _
      %p723 = scmp.le.s32.totalorder 2, %s17
      // Predicated region
      $region49: #{tpu_custom_call.1} parent=5 // pred_check
        %p724 = pneg %p723
      $region50: #{tpu_custom_call.1} parent=5 // pred_check_branch
        %726 = sbr.rel (%p724) target = $region52
      $region51: #{tpu_custom_call.1} parent=5 // pred_region
        %s727 = ssub.s32 %s17, 2
        // Predicated region
        $region53: #{tpu_custom_call.1} parent=51 // pred_check
          %p728 = pneg %p107
        $region54: #{tpu_custom_call.1} parent=51 // pred_check_branch
          %730 = sbr.rel (%p728) target = $region56
        $region55: #{tpu_custom_call.1} parent=51 // pred_region
          %s731 = sand.u32 %s92, 1
          %s732 = scalar_lea.sflag [#allocation5], %s731
          %s733 = sand.u32 %s92, 1
          %s734 = smul.addr %s733, 32
          %s735 = scalar_lea.vmem [#allocation8], %s734
          %736 = dma.done %s732, 512
        $region56: #{tpu_custom_call.1} parent=51 // pred_fallthru
          _
        // Predicated region
        $region57: #{tpu_custom_call.1} parent=51 // pred_check
          %p737 = pneg %p133
        $region58: #{tpu_custom_call.1} parent=51 // pred_check_branch
          %739 = sbr.rel (%p737) target = $region60
        $region59: #{tpu_custom_call.1} parent=51 // pred_region
          %p740 = scmp.lt.s32.totalorder %s28, 1
          %s741 = scalar_select %p740, %s28, 1
          %s742 = smul.addr %s741, 4
          %s743 = smul.addr %s742, 8
          %s744 = scalar_lea.vmem %s3, %s743
        $region60: #{tpu_custom_call.1} parent=51 // pred_fallthru
          _
      $region52: #{tpu_custom_call.1} parent=5 // pred_fallthru
        _
    $region6: #{tpu_custom_call.1} parent=1 // loop_footer
      %s21 = sadd.s32 1, %s17
    $region7: #{tpu_custom_call.1} parent=1 // loop_footer_branch
      %16 = sbr.rel target = $region3
    $region8: #{tpu_custom_call.1} parent=1 // loop_exit
      _
    %745 = vsyncpa [#allocation4], 1
    %s746 = scalar_lea.sflag [#allocation4], 1
    %747 = vsyncpa %s746, 1
    %748 = vsyncpa [#allocation7], 1
    %749 = vsyncpa [#allocation5], 1
    %s750 = scalar_lea.sflag [#allocation5], 1
    %751 = vsyncpa %s750, 1

</llo_original>
